<compile_context>
chip_gen: v7x
topology: tpu7x:2x2x1
jax: 0.10.0
libtpu: 0.0.40
codegen_flags: <defaults>
</compile_context>

<pallas_src>
import functools

import jax
import jax.numpy as jnp
from jax.experimental import pallas as pl
from jax.experimental.pallas import tpu as pltpu


def _round_up(x: int, m: int) -> int:
    return ((x + m - 1) // m) * m


def _cdiv(a: int, b: int) -> int:
    return -(-a // b)


def _avg_readout_kernel(x_ref, o_ref, acc_ref, *, inv_n: float,
                        total_blocks: int, blocks_per_core: int, rem: int):
    # x_ref:  (TN, TH) input tile
    # o_ref:  (1, 1, TH) f32 partial-sum tile (same block across the N axis)
    # acc_ref:(1, TH) f32 scratch accumulator
    c = pl.program_id(0)  # N-block chunk (parallel; v7x core split)
    k = pl.program_id(2)  # reduction step within the chunk (arbitrary, LAST)

    @pl.when(k == 0)
    def _init():
        acc_ref[...] = jnp.zeros_like(acc_ref)

    if rem == 0:
        # Every N block is full: no masking anywhere.
        acc_ref[...] += jnp.sum(x_ref[...], axis=0, dtype=jnp.float32,
                                keepdims=True)
    else:
        # Only the globally-last N block is ragged; mask just that one so the
        # per-step cost stays a plain sublane reduce.
        blk = c * blocks_per_core + k
        is_last = blk == (total_blocks - 1)

        @pl.when(is_last)
        def _ragged():
            rows = jax.lax.broadcasted_iota(jnp.int32, x_ref.shape, 0)
            x = x_ref[...]
            x = jnp.where(rows < rem, x, jnp.zeros_like(x))
            acc_ref[...] += jnp.sum(x, axis=0, dtype=jnp.float32,
                                    keepdims=True)

        @pl.when(jnp.logical_not(is_last))
        def _full():
            acc_ref[...] += jnp.sum(x_ref[...], axis=0, dtype=jnp.float32,
                                    keepdims=True)

    @pl.when(k == pl.num_programs(2) - 1)
    def _finalize():
        # Scale once by 1/original_N; partials from the two chunks are added
        # in the wrapper, so the sum of scaled partials is the mean.
        o_ref[0] = acc_ref[...] * inv_n


def avg_readout(seq: jax.Array, *, force_kernel: bool = False) -> jax.Array:
    """Mean over axis 0 of a [N, H] array, computed with a Pallas TPU kernel."""
    n, h = seq.shape
    dtype = seq.dtype
    itemsize = jnp.dtype(dtype).itemsize

    # Tiny inputs: pallas_call fixed overhead dominates; XLA's fused reduction
    # is strictly faster there.
    if not force_kernel and n * h * itemsize < (1 << 20):
        return jnp.mean(seq, axis=0)

    sub = max(8, 32 // itemsize)       # native sublane count (8 f32/16 bf16/32 i8)
    budget = 32 * 1024 * 1024          # double-buffered input bytes; safe on v7x

    # --- tile selection -----------------------------------------------------
    th_full = _round_up(h, 128)
    tn_probe = min(512, _round_up(n, sub))
    if 2 * th_full * tn_probe * itemsize <= budget:
        th = th_full                   # full-width H: contiguous DMAs, 1 H tile
    else:
        th = max(128, (budget // (2 * 2048 * itemsize)) // 128 * 128)

    tn_max = budget // (2 * th * itemsize)
    tn = min(2048, tn_max, _round_up(n, sub))
    tn = max(sub, (tn // sub) * sub)

    hg = _cdiv(h, th)                  # H tiles
    nb = _cdiv(n, tn)                  # total N blocks
    rem = n % tn                       # rows in the ragged last block (0 = full)

    # 2-way split of the N blocks across a leading parallel axis: lets both
    # v7x TensorCores stream HBM when there is only one H tile.  Only when the
    # blocks divide evenly (no out-of-range block indices) and there is enough
    # work per chunk.  On 1-TC chips the axis simply runs sequentially.
    nc = 2 if (hg == 1 and nb % 2 == 0 and nb >= 4) else 1
    nbc = nb // nc

    grid = (nc, hg, nbc)               # reduction axis LAST

    kernel = functools.partial(
        _avg_readout_kernel,
        inv_n=1.0 / n,
        total_blocks=nb,
        blocks_per_core=nbc,
        rem=rem,
    )

    partials = pl.pallas_call(
        kernel,
        out_shape=jax.ShapeDtypeStruct((nc, 1, h), jnp.float32),
        grid_spec=pltpu.PrefetchScalarGridSpec(
            num_scalar_prefetch=0,
            grid=grid,
            in_specs=[pl.BlockSpec((tn, th),
                                   lambda c, j, k: (c * nbc + k, j))],
            out_specs=pl.BlockSpec((1, 1, th), lambda c, j, k: (c, 0, j)),
            scratch_shapes=[pltpu.VMEM((1, th), jnp.float32)],
        ),
        compiler_params=pltpu.CompilerParams(
            dimension_semantics=("parallel", "parallel", "arbitrary"),
            vmem_limit_bytes=48 * 1024 * 1024,
        ),
        cost_estimate=pl.CostEstimate(
            flops=n * h,
            transcendentals=0,
            bytes_accessed=n * h * itemsize + nc * h * 4,
        ),
    )(seq)

    out = partials[:, 0, :]
    out = out.sum(axis=0) if nc > 1 else out[0]
    return out.astype(dtype)


if __name__ == "__main__":
    key = jax.random.PRNGKey(0)

    # Small demo matching the module's forward: seq=8, hidden=32.
    N, H = 8, 32
    seq = jax.random.normal(key, (N, H), dtype=jnp.float32)
    out = avg_readout(seq, force_kernel=True)   # force the Pallas path
    jax.block_until_ready(out)
    ref = jnp.mean(seq, axis=0)
    assert out.shape == (H,)
    assert jnp.allclose(out, ref, atol=1e-6, rtol=1e-6)

    # Unaligned shape: single ragged N block, full-width H tile, no padding.
    seq2 = jax.random.normal(jax.random.PRNGKey(1), (1100, 640),
                             dtype=jnp.float32)
    out2 = avg_readout(seq2)
    jax.block_until_ready(out2)
    assert out2.shape == (640,)
    assert jnp.allclose(out2, jnp.mean(seq2, axis=0), atol=1e-4, rtol=1e-4)

    # Larger shape exercising the 2-way N-block split (leading parallel axis)
    # together with ragged-last-block masking.
    seq3 = jax.random.normal(jax.random.PRNGKey(2), (7000, 384),
                             dtype=jnp.float32)
    out3 = avg_readout(seq3)
    jax.block_until_ready(out3)
    assert out3.shape == (384,)
    assert jnp.allclose(out3, jnp.mean(seq3, axis=0), atol=1e-4, rtol=1e-4)

    print("KERNEL_OK")
</pallas_src>

<mosaic_0001>
module attributes {stable_mosaic.version = 11 : i64} {
  func.func @_avg_readout_kernel(%arg0: i32, %arg1: i32, %arg2: i32, %arg3: memref<8x128xf32, #tpu.memory_space<vmem>>, %arg4: memref<1x1x128xf32, #tpu.memory_space<vmem>>, %arg5: memref<1x128xf32, #tpu.memory_space<vmem>>) attributes {dimension_semantics = [#tpu.dimension_semantics<parallel>, #tpu.dimension_semantics<parallel>, #tpu.dimension_semantics<arbitrary>], iteration_bounds = array<i64: 1, 1, 1>, scalar_prefetch = 0 : i64, scratch_operands = 1 : i64, tpu.core_type = #tpu.core_type<tc>, window_params = [{transform_indices = @transform_0, window_bounds = array<i64: 8, 128>}, {transform_indices = @transform_1, window_bounds = array<i64: 1, 1, 128>}]} {
    %c0_i32 = arith.constant 0 : i32
    %0 = arith.cmpi eq, %arg2, %c0_i32 : i32
    %1 = arith.extui %0 : i1 to i32
    %c0_i32_0 = arith.constant 0 : i32
    %2 = arith.cmpi ne, %1, %c0_i32_0 : i32
    scf.if %2 {
      %cst_8 = arith.constant 0.000000e+00 : f32
      %12 = vector.broadcast %cst_8 : f32 to vector<1x128xf32>
      %c0_9 = arith.constant 0 : index
      %c0_10 = arith.constant 0 : index
      %13 = vector.load %arg5[%c0_9, %c0_10] : memref<1x128xf32, #tpu.memory_space<vmem>>, vector<1x128xf32>
      tpu.vector_store %arg5[%c0_9, %c0_10], %12 {strides = array<i32>} : memref<1x128xf32, #tpu.memory_space<vmem>>, vector<1x128xf32>,
    } else {
    }
    %c0 = arith.constant 0 : index
    %c0_1 = arith.constant 0 : index
    %3 = vector.load %arg5[%c0, %c0_1] : memref<1x128xf32, #tpu.memory_space<vmem>>, vector<1x128xf32>
    %c0_2 = arith.constant 0 : index
    %c0_3 = arith.constant 0 : index
    %4 = vector.load %arg3[%c0_2, %c0_3] : memref<8x128xf32, #tpu.memory_space<vmem>>, vector<8x128xf32>
    %cst = arith.constant dense<0.000000e+00> : vector<128xf32>
    %5 = vector.multi_reduction <add>, %4, %cst [0] : vector<8x128xf32> to vector<128xf32>
    %6 = vector.shape_cast %5 : vector<128xf32> to vector<1x128xf32>
    %7 = arith.addf %3, %6 : vector<1x128xf32>
    %c0_4 = arith.constant 0 : index
    %c0_5 = arith.constant 0 : index
    %8 = vector.load %arg5[%c0_4, %c0_5] : memref<1x128xf32, #tpu.memory_space<vmem>>, vector<1x128xf32>
    tpu.vector_store %arg5[%c0_4, %c0_5], %7 {strides = array<i32>} : memref<1x128xf32, #tpu.memory_space<vmem>>, vector<1x128xf32>,
    %c0_i32_6 = arith.constant 0 : i32
    %9 = arith.cmpi eq, %arg2, %c0_i32_6 : i32
    %10 = arith.extui %9 : i1 to i32
    %c0_i32_7 = arith.constant 0 : i32
    %11 = arith.cmpi ne, %10, %c0_i32_7 : i32
    scf.if %11 {
      %c0_8 = arith.constant 0 : index
      %c0_9 = arith.constant 0 : index
      %12 = vector.load %arg5[%c0_8, %c0_9] : memref<1x128xf32, #tpu.memory_space<vmem>>, vector<1x128xf32>
      %cst_10 = arith.constant 1.250000e-01 : f32
      %13 = vector.broadcast %cst_10 : f32 to vector<1x128xf32>
      %14 = arith.mulf %12, %13 : vector<1x128xf32>
      %c0_11 = arith.constant 0 : index
      %c0_12 = arith.constant 0 : index
      %c0_13 = arith.constant 0 : index
      %15 = vector.load %arg4[%c0_11, %c0_12, %c0_13] : memref<1x1x128xf32, #tpu.memory_space<vmem>>, vector<1x1x128xf32>
      %16 = vector.shape_cast %15 : vector<1x1x128xf32> to vector<1x128xf32>
      %17 = vector.shape_cast %14 : vector<1x128xf32> to vector<1x1x128xf32>
      tpu.vector_store %arg4[%c0_11, %c0_12, %c0_13], %17 {strides = array<i32>} : memref<1x1x128xf32, #tpu.memory_space<vmem>>, vector<1x1x128xf32>,
    } else {
    }
    return
  }
  func.func @transform_0(%arg0: i32, %arg1: i32, %arg2: i32) -> (i32, i32) {
    %c1_i32 = arith.constant 1 : i32
    %0 = arith.muli %arg0, %c1_i32 : i32
    %1 = arith.addi %0, %arg2 : i32
    %c0_i32 = arith.constant 0 : i32
    return %1, %arg1 : i32, i32
  }
  func.func @transform_1(%arg0: i32, %arg1: i32, %arg2: i32) -> (i32, i32, i32) {
    %c0_i32 = arith.constant 0 : i32
    %c0_i32_0 = arith.constant 0 : i32
    return %arg0, %c0_i32, %arg1 : i32, i32, i32
  }
}

</mosaic_0001>

<llo_original>
// kernel: tpu_custom_call.1
$region0: #{tpu_custom_call.1}
  #allocation0 [shape = 'u32[]', space=smem, size = 0x4, offset = 0x4, fixed_abs, tag = 'smem constant byte address 0x4 - core index']
  #allocation1 [shape = 'u32[144,128]{1,0:T(1,128)}', space=vmem, size = 0x12000, scoped, tag = 'internal scratch']
  #allocation2 [shape = 'f32[1,128]{1,0:T(1,128)}', space=vmem, size = 0x200, scoped, tag = 'scratch operand']
  %s0 = inlined_call_operand.hbm [shape: f32[8,32], index: 0, kind: input, shape index: {}]
  %s1 = inlined_call_operand.hbm [shape: f32[1,1,32], index: 1, kind: output, shape index: {}]
  %s2 = sld [smem:[#allocation0]]
  $region26: #{tpu_custom_call.1} parent=0
    _
  %s4 = ssub.s32 1, %s2
  %s5 = scalar_select 0, %s4, %s2
  $region1: #{tpu_custom_call.1} parent=0
    #allocation3 [shape = 'u8[4096]{0}', space=vmem, size = 0x1000, scoped, tag = 'input window, operand 0, single buffered']
    #allocation4 [shape = 's32[1]{0}', space=sflag, size = 0x4, scoped, tag = 'scoped memory for tpu_custom_call.1']
    #allocation5 [shape = 's32[1]{0}', space=sflag, size = 0x4, scoped, tag = 'scoped memory for tpu_custom_call.1']
    #allocation6 [shape = 'u8[512]{0}', space=vmem, size = 0x400, scoped, tag = 'output window, operand 0, single buffered']
    %6 = vsyncpa [#allocation4], 0
    %7 = vsyncpa [#allocation5], 0
    // Predicated region
    $region2: #{tpu_custom_call.1} parent=1 // pred_check
      _
    $region3: #{tpu_custom_call.1} parent=1 // pred_check_branch
      %9 = sbr.rel (0) target = $region5
    $region4: #{tpu_custom_call.1} parent=1 // pred_region
      %s10 = sadd.s32 0, 0
      %s12 = ssub.s32 128, 128
      %13 = vsyncadd [#allocation4], %s12
      %s14 = smul.addr %s10, 128
      %s15 = scalar_lea.hbm %s0, %s14
      %s17 = sshll.u32 [#allocation3], 4
      %s18 = int_to_ptr.vmem [resolvable:$true] %s17
      %20 = dma.hbm_to_vmem [thread:$0]  %s15, 128, %s18, [#allocation4]
    $region5: #{tpu_custom_call.1} parent=1 // pred_fallthru
      _
    // Predicated region
    $region6: #{tpu_custom_call.1} parent=1 // pred_check
      _
    $region7: #{tpu_custom_call.1} parent=1 // pred_check_branch
      %22 = sbr.rel (0) target = $region9
    $region8: #{tpu_custom_call.1} parent=1 // pred_region
      %23 = dma.done [#allocation4], 128
    $region9: #{tpu_custom_call.1} parent=1 // pred_fallthru
      _
    %s24 = sadd.s32 0, 0
    %p25 = scmp.eq.s32.totalorder 0, 0
    // Predicated region
    $region10: #{tpu_custom_call.1} parent=1 // pred_check
      %p26 = pneg %p25
    $region11: #{tpu_custom_call.1} parent=1 // pred_check_branch
      %28 = sbr.rel (%p26) target = $region13
    $region12: #{tpu_custom_call.1} parent=1 // pred_region
      %29 = vst [vmem:[#allocation2] sm:$0x1] 0.0
    $region13: #{tpu_custom_call.1} parent=1 // pred_fallthru
      _
    %v30 = vld [vmem:[#allocation2] sm:$0x1]
    %v31 = vld [vmem:[#allocation3] sm:$0xff]
    %v32 = vrot.slane %v31, 4
    %v33 = vadd.f32 %v31, %v32
    %v34 = vrot.slane %v33, 2
    %v35 = vadd.f32 %v33, %v34
    %v36 = vrot.slane %v35, 1
    %v37 = vadd.f32 %v35, %v36
    %v38 = vadd.f32 %v30, %v37
    %39 = vst [vmem:[#allocation2] sm:$0x1] %v38
    // Predicated region
    $region14: #{tpu_custom_call.1} parent=1 // pred_check
      %p40 = pneg %p25
    $region15: #{tpu_custom_call.1} parent=1 // pred_check_branch
      %42 = sbr.rel (%p40) target = $region17
    $region16: #{tpu_custom_call.1} parent=1 // pred_region
      %v43 = vld [vmem:[#allocation2] sm:$0x1]
      %v44 = vmul.f32 %v43, 0.125
      %45 = vst [vmem:[#allocation6] sm:$0x1] %v44
    $region17: #{tpu_custom_call.1} parent=1 // pred_fallthru
      _
    // Predicated region
    $region18: #{tpu_custom_call.1} parent=1 // pred_check
      _
    $region19: #{tpu_custom_call.1} parent=1 // pred_check_branch
      %47 = sbr.rel (0) target = $region21
    $region20: #{tpu_custom_call.1} parent=1 // pred_region
      %s49 = ssub.s32 16, 16
      %50 = vsyncadd [#allocation5], %s49
      %s52 = sshll.u32 [#allocation6], 4
      %s53 = int_to_ptr.vmem [resolvable:$true] %s52
      %55 = dma.vmem_to_hbm [thread:$0]  %s53, 16, %s1, [#allocation5]
    $region21: #{tpu_custom_call.1} parent=1 // pred_fallthru
      _
    // Predicated region
    $region22: #{tpu_custom_call.1} parent=1 // pred_check
      _
    $region23: #{tpu_custom_call.1} parent=1 // pred_check_branch
      %57 = sbr.rel (0) target = $region25
    $region24: #{tpu_custom_call.1} parent=1 // pred_region
      %58 = dma.done [#allocation5], 16
    $region25: #{tpu_custom_call.1} parent=1 // pred_fallthru
      _
    %59 = vsyncpa [#allocation4], 1
    %60 = vsyncpa [#allocation5], 1

</llo_original>
